<compile_context>
chip_gen: v5e
topology: v5e:2x2
jax: 0.10.0
libtpu: 0.0.40
codegen_flags: <defaults>
</compile_context>

<pallas_src>
import functools
import math

import jax
import jax.numpy as jnp
from jax.experimental import pallas as pl
from jax.experimental.pallas import tpu as pltpu


# ----------------------------- math helpers (kernel & reference) -------------

def _layernorm(x, g, b, eps=1e-5):
    mu = jnp.mean(x, axis=-1, keepdims=True)
    var = jnp.mean((x - mu) ** 2, axis=-1, keepdims=True)
    return (x - mu) * jax.lax.rsqrt(var + eps) * g + b


def _softmax(x):
    m = jnp.max(x, axis=-1, keepdims=True)
    e = jnp.exp(x - m)
    return e / jnp.sum(e, axis=-1, keepdims=True)


def _gelu_tanh(x):
    # TODO(synk): torch nn.GELU defaults to the exact (erf) GELU; the tanh
    # approximation is used since erf lowering inside Mosaic is not guaranteed.
    c = 0.7978845608028654  # sqrt(2/pi)
    return 0.5 * x * (1.0 + jnp.tanh(c * (x + 0.044715 * x * x * x)))


# ----------------------------- small planning helpers -------------------------

def _pick_block_b(batch, tokens_per_elem, target_rows=128):
    """Batch elements per grid step: aim for >=128 flattened rows per step (MXU
    M-tile), but keep >=2 grid steps when the batch allows so both v7x
    TensorCores get work via the "parallel" grid axis."""
    bb = max(1, min(batch, -(-target_rows // tokens_per_elem)))
    if batch >= 2:
        bb = min(bb, max(1, batch // 2))
    while batch % bb:
        bb -= 1
    return bb


def _f32_bytes(*shapes):
    return sum(4 * math.prod(s) for s in shapes)


def _vmem_limit(block_bytes, scratch_bytes=0):
    # Explicit VMEM budget: double-buffered pipeline blocks + scratch with 4x
    # headroom for compiler temporaries, clamped well under v7x's 64 MiB VMEM.
    need = 2 * block_bytes + scratch_bytes
    return int(min(max(4 * need, 16 * 2**20), 48 * 2**20))


# ----------------------------- Pallas kernels --------------------------------

def patch_emb_kernel(p_ref, w_ref, b_ref, pos_ref, o_ref):
    # p_ref: (blk_b, N, P)  w_ref: (P, D)  b_ref: (1, D)  pos_ref: (N, D)
    blk_b, n_patches, patch_dim = p_ref.shape
    dim = w_ref.shape[1]
    x = p_ref[...].reshape(blk_b * n_patches, patch_dim)   # one big GEMM
    y = jnp.dot(x, w_ref[...], preferred_element_type=jnp.float32) + b_ref[...]
    y = y.reshape(blk_b, n_patches, dim) + pos_ref[...][None]
    o_ref[...] = y.astype(o_ref.dtype)


def transformer_layer_kernel(x_ref, ln1g_ref, ln1b_ref, wqkv_ref, wo_ref, bo_ref,
                             ln2g_ref, ln2b_ref, w1_ref, b1_ref, w2_ref, b2_ref,
                             o_ref, ctx_ref, *, heads, dim_head):
    blk_b, n, dim = x_ref.shape
    inner = heads * dim_head
    rows = blk_b * n
    scale = dim_head ** -0.5

    # All row-wise math works on the flattened (rows, dim) slab.
    x = x_ref[...].reshape(rows, dim)

    # --- PreNorm + multi-head self-attention -------------------------------
    xn = _layernorm(x, ln1g_ref[...], ln1b_ref[...])
    # ONE QKV projection matmul for all heads.
    qkv = jnp.dot(xn, wqkv_ref[...], preferred_element_type=jnp.float32)  # (rows, 3*inner)
    qkv = qkv.reshape(blk_b, n, 3 * inner)

    def gather_heads(base):
        # -> (heads*blk_b, n, dim_head), head-major batch for the MXU.
        return jnp.concatenate(
            [qkv[:, :, base + h * dim_head: base + (h + 1) * dim_head]
             for h in range(heads)], axis=0)

    q = gather_heads(0) * scale          # fold scale into q (smaller than scores)
    k = gather_heads(inner)
    v = gather_heads(2 * inner)

    # scores: ONE batched matmul over (heads*blk_b)  -> (heads*blk_b, n, n)
    dots = jax.lax.dot_general(q, k, (((2,), (2,)), ((0,), (0,))),
                               preferred_element_type=jnp.float32)
    dots = dots - jnp.max(dots, axis=-1, keepdims=True)
    e = jnp.exp(dots)
    # softmax denominator on the EUP slot (approximate reciprocal).
    attn = e * pl.reciprocal(jnp.sum(e, axis=-1, keepdims=True), approx=True)

    # context: ONE batched matmul -> (heads*blk_b, n, dim_head)
    ctx = jax.lax.dot_general(attn, v, (((2,), (1,)), ((0,), (0,))),
                              preferred_element_type=jnp.float32)

    # Reassemble heads into a lane-dense (rows, inner) scratch, then ONE
    # (rows, inner) @ (inner, dim) output projection (instead of `heads`
    # accumulated per-head matmuls).
    for h in range(heads):
        ctx_ref[:, h * dim_head:(h + 1) * dim_head] = (
            ctx[h * blk_b:(h + 1) * blk_b].reshape(rows, dim_head))
    x = x + jnp.dot(ctx_ref[...], wo_ref[...],
                    preferred_element_type=jnp.float32) + bo_ref[...]

    # --- PreNorm + MLP ------------------------------------------------------
    # TODO(synk): for production ViT-Base sizes tile this over 128-row token
    # blocks to bound the live (rows, mlp_dim) intermediate (v7x VMEM budget).
    xn2 = _layernorm(x, ln2g_ref[...], ln2b_ref[...])
    h1 = _gelu_tanh(
        jnp.dot(xn2, w1_ref[...], preferred_element_type=jnp.float32) + b1_ref[...])
    h2 = jnp.dot(h1, w2_ref[...], preferred_element_type=jnp.float32) + b2_ref[...]
    o_ref[...] = (x + h2).reshape(blk_b, n, dim).astype(o_ref.dtype)


# ----------------------------- Pallas wrappers --------------------------------

def patch_embed(patches, w, b, pos, block_b):
    B, N, P = patches.shape
    D = w.shape[1]
    block_bytes = _f32_bytes((block_b, N, P), (P, D), (1, D), (N, D), (block_b, N, D))
    return pl.pallas_call(
        patch_emb_kernel,
        out_shape=jax.ShapeDtypeStruct((B, N, D), jnp.float32),
        grid_spec=pltpu.PrefetchScalarGridSpec(
            num_scalar_prefetch=0,
            grid=(B // block_b,),
            in_specs=[
                pl.BlockSpec((block_b, N, P), lambda i: (i, 0, 0)),
                pl.BlockSpec((P, D), lambda i: (0, 0)),
                pl.BlockSpec((1, D), lambda i: (0, 0)),
                pl.BlockSpec((N, D), lambda i: (0, 0)),
            ],
            out_specs=pl.BlockSpec((block_b, N, D), lambda i: (i, 0, 0)),
        ),
        compiler_params=pltpu.CompilerParams(
            dimension_semantics=("parallel",),
            vmem_limit_bytes=_vmem_limit(block_bytes)),
    )(patches, w, b, pos)


def transformer_layer(x, layer_params, heads, dim_head, block_b):
    B, n, D = x.shape
    inner = heads * dim_head
    kernel = functools.partial(transformer_layer_kernel,
                               heads=heads, dim_head=dim_head)

    # Weights: full-array blocks, constant index map (kept resident across the
    # batch grid).
    # TODO(synk): for real ViT-Base weights on v7x, store them in bf16 and
    # single-buffer these specs to stay inside the 64 MiB VMEM.
    def const_spec(a):
        nd = a.ndim
        return pl.BlockSpec(a.shape, lambda i, _nd=nd: (0,) * _nd)

    block_bytes = _f32_bytes((block_b, n, D), (block_b, n, D),
                             *[p.shape for p in layer_params])
    scratch_bytes = _f32_bytes((block_b * n, inner))

    return pl.pallas_call(
        kernel,
        out_shape=jax.ShapeDtypeStruct((B, n, D), jnp.float32),
        grid_spec=pltpu.PrefetchScalarGridSpec(
            num_scalar_prefetch=0,
            grid=(B // block_b,),
            in_specs=[pl.BlockSpec((block_b, n, D), lambda i: (i, 0, 0))]
                     + [const_spec(p) for p in layer_params],
            out_specs=pl.BlockSpec((block_b, n, D), lambda i: (i, 0, 0)),
            scratch_shapes=[pltpu.VMEM((block_b * n, inner), jnp.float32)],
        ),
        compiler_params=pltpu.CompilerParams(
            dimension_semantics=("parallel",),
            vmem_limit_bytes=_vmem_limit(block_bytes, scratch_bytes)),
    )(x, *layer_params)


# ----------------------------- parameter init ---------------------------------

def init_params(key, *, channels, patch_size, num_patches, dim, depth,
                heads, dim_head, mlp_dim):
    patch_dim = channels * patch_size * patch_size
    inner = heads * dim_head
    keys = jax.random.split(key, 3 + depth)
    params = {
        "emb_w": 0.02 * jax.random.normal(keys[0], (patch_dim, dim), jnp.float32),
        "emb_b": 0.02 * jax.random.normal(keys[1], (1, dim), jnp.float32),
        "pos": jax.random.normal(keys[2], (1, num_patches + 1, dim), jnp.float32),
        "layers": [],
    }
    for l in range(depth):
        ks = jax.random.split(keys[3 + l], 8)
        layer = (
            jnp.ones((1, dim), jnp.float32),                                   # ln1 gamma
            jnp.zeros((1, dim), jnp.float32),                                  # ln1 beta
            0.02 * jax.random.normal(ks[0], (dim, 3 * inner), jnp.float32),    # w_qkv
            0.02 * jax.random.normal(ks[1], (inner, dim), jnp.float32),        # w_out
            0.02 * jax.random.normal(ks[2], (1, dim), jnp.float32),            # b_out
            jnp.ones((1, dim), jnp.float32),                                   # ln2 gamma
            jnp.zeros((1, dim), jnp.float32),                                  # ln2 beta
            0.02 * jax.random.normal(ks[3], (dim, mlp_dim), jnp.float32),      # w_ff1
            0.02 * jax.random.normal(ks[4], (1, mlp_dim), jnp.float32),        # b_ff1
            0.02 * jax.random.normal(ks[5], (mlp_dim, dim), jnp.float32),      # w_ff2
            0.02 * jax.random.normal(ks[6], (1, dim), jnp.float32),            # b_ff2
        )
        params["layers"].append(layer)
    return params


# ----------------------------- encoder forward ---------------------------------

def to_patches(img, patch_size):
    # einops: 'b c (h p1) (w p2) -> b (h w) (p1 p2 c)'
    B, C, H, W = img.shape
    p = patch_size
    h, w = H // p, W // p
    x = img.reshape(B, C, h, p, w, p)
    x = x.transpose(0, 2, 4, 3, 5, 1)            # (B, h, w, p1, p2, C)
    return x.reshape(B, h * w, p * p * C)


def vit_encoder_forward(img, params, cfg, mask_key):
    B = img.shape[0]
    patches = to_patches(img, cfg["patch_size"])
    N = patches.shape[1]

    # Pallas kernel: patch embedding + positional embedding (flattened GEMM).
    tokens = patch_embed(patches, params["emb_w"], params["emb_b"],
                         params["pos"][0, 1:N + 1],
                         block_b=_pick_block_b(B, N))

    # random masking (glue, plain JAX)
    num_masked = int(cfg["masking_ratio"] * N)
    rand = jax.random.uniform(mask_key, (B, N))
    rand_indices = jnp.argsort(rand, axis=-1)
    masked_indices = rand_indices[:, :num_masked]
    unmasked_indices = rand_indices[:, num_masked:]
    tokens = jnp.take_along_axis(tokens, unmasked_indices[..., None], axis=1)
    masked_patches = jnp.take_along_axis(patches, masked_indices[..., None], axis=1)

    # Pallas kernels: fused transformer layers.
    x = tokens
    block_b = _pick_block_b(B, x.shape[1])
    for layer_params in params["layers"]:
        x = transformer_layer(x, layer_params, cfg["heads"], cfg["dim_head"],
                              block_b)

    return B, num_masked, masked_indices, masked_patches, x


# ----------------------------- pure-JAX reference -------------------------------

def ref_transformer_layer(x, p, heads, dim_head):
    ln1g, ln1b, wqkv, wo, bo, ln2g, ln2b, w1, b1, w2, b2 = p
    B, n, D = x.shape
    inner = heads * dim_head
    xn = _layernorm(x, ln1g, ln1b)
    qkv = xn @ wqkv
    q, k, v = jnp.split(qkv, 3, axis=-1)
    def to_heads(t):
        return t.reshape(B, n, heads, dim_head).transpose(0, 2, 1, 3)
    q, k, v = map(to_heads, (q, k, v))
    dots = jnp.einsum("bhnd,bhmd->bhnm", q, k) * (dim_head ** -0.5)
    attn = _softmax(dots)
    out = jnp.einsum("bhnm,bhmd->bhnd", attn, v)
    out = out.transpose(0, 2, 1, 3).reshape(B, n, inner)
    x = x + out @ wo + bo
    xn2 = _layernorm(x, ln2g, ln2b)
    h1 = _gelu_tanh(xn2 @ w1 + b1)
    return x + h1 @ w2 + b2


def ref_forward(img, params, cfg, mask_key):
    B = img.shape[0]
    patches = to_patches(img, cfg["patch_size"])
    N = patches.shape[1]
    tokens = patches @ params["emb_w"] + params["emb_b"] + params["pos"][:, 1:N + 1]
    num_masked = int(cfg["masking_ratio"] * N)
    rand = jax.random.uniform(mask_key, (B, N))
    rand_indices = jnp.argsort(rand, axis=-1)
    masked_indices = rand_indices[:, :num_masked]
    unmasked_indices = rand_indices[:, num_masked:]
    tokens = jnp.take_along_axis(tokens, unmasked_indices[..., None], axis=1)
    masked_patches = jnp.take_along_axis(patches, masked_indices[..., None], axis=1)
    x = tokens
    for layer_params in params["layers"]:
        x = ref_transformer_layer(x, layer_params, cfg["heads"], cfg["dim_head"])
    return B, num_masked, masked_indices, masked_patches, x


# ----------------------------- main ---------------------------------------------

if __name__ == "__main__":
    # Lane-dense demo config: dim = 128 (one full lane group), 64 patches,
    # 16 unmasked tokens per image, batch 8.
    cfg = dict(image_size=32, patch_size=4, channels=3, dim=128, depth=2,
               heads=4, dim_head=32, mlp_dim=256, masking_ratio=0.75)

    key = jax.random.PRNGKey(0)
    k_img, k_param, k_mask = jax.random.split(key, 3)

    B = 8
    img = jax.random.normal(
        k_img, (B, cfg["channels"], cfg["image_size"], cfg["image_size"]),
        jnp.float32)

    num_patches = (cfg["image_size"] // cfg["patch_size"]) ** 2
    params = init_params(k_param,
                         channels=cfg["channels"], patch_size=cfg["patch_size"],
                         num_patches=num_patches, dim=cfg["dim"],
                         depth=cfg["depth"], heads=cfg["heads"],
                         dim_head=cfg["dim_head"], mlp_dim=cfg["mlp_dim"])

    batch, num_masked, masked_idx, masked_patches, encoded = vit_encoder_forward(
        img, params, cfg, k_mask)
    jax.block_until_ready(encoded)

    # correctness check vs pure-JAX reference
    _, _, ref_masked_idx, ref_masked_patches, ref_encoded = ref_forward(
        img, params, cfg, k_mask)
    assert batch == B and num_masked == int(cfg["masking_ratio"] * num_patches)
    assert jnp.array_equal(masked_idx, ref_masked_idx)
    assert jnp.allclose(masked_patches, ref_masked_patches, atol=1e-5, rtol=1e-5)
    # tolerance accounts for the approximate (EUP) softmax reciprocal and
    # MXU pass differences vs the XLA reference matmuls.
    assert jnp.allclose(encoded, ref_encoded, atol=1e-2, rtol=1e-2), (
        float(jnp.max(jnp.abs(encoded - ref_encoded))))

    print("KERNEL_OK")
</pallas_src>

<mosaic_0001>
module attributes {stable_mosaic.version = 11 : i64} {
  func.func @patch_emb_kernel(%arg0: i32, %arg1: memref<2x64x48xf32, #tpu.memory_space<vmem>>, %arg2: memref<48x128xf32, #tpu.memory_space<vmem>>, %arg3: memref<1x128xf32, #tpu.memory_space<vmem>>, %arg4: memref<64x128xf32, #tpu.memory_space<vmem>>, %arg5: memref<2x64x128xf32, #tpu.memory_space<vmem>>) attributes {dimension_semantics = [#tpu.dimension_semantics<parallel>], iteration_bounds = array<i64: 4>, scalar_prefetch = 0 : i64, scratch_operands = 0 : i64, tpu.core_type = #tpu.core_type<tc>, window_params = [{transform_indices = @transform_0, window_bounds = array<i64: 2, 64, 48>}, {pipeline_mode = #tpu.pipeline_mode<synchronous>, transform_indices = @transform_1, window_bounds = array<i64: 48, 128>}, {pipeline_mode = #tpu.pipeline_mode<synchronous>, transform_indices = @transform_2, window_bounds = array<i64: 1, 128>}, {pipeline_mode = #tpu.pipeline_mode<synchronous>, transform_indices = @transform_3, window_bounds = array<i64: 64, 128>}, {transform_indices = @transform_4, window_bounds = array<i64: 2, 64, 128>}]} {
    %c0 = arith.constant 0 : index
    %c0_0 = arith.constant 0 : index
    %c0_1 = arith.constant 0 : index
    %0 = vector.load %arg1[%c0, %c0_0, %c0_1] : memref<2x64x48xf32, #tpu.memory_space<vmem>>, vector<2x64x48xf32>
    %1 = vector.shape_cast %0 : vector<2x64x48xf32> to vector<128x48xf32>
    %c0_2 = arith.constant 0 : index
    %c0_3 = arith.constant 0 : index
    %2 = vector.load %arg2[%c0_2, %c0_3] : memref<48x128xf32, #tpu.memory_space<vmem>>, vector<48x128xf32>
    %cst = arith.constant dense<0.000000e+00> : vector<128x128xf32>
    %3 = tpu.matmul %1, %2, %cst {dimension_numbers = #tpu.dot_dimension_numbers<[1], [0], [0], [1], [0, 0, 1, 1], [], []>} : vector<128x48xf32>, vector<48x128xf32>, vector<128x128xf32> -> vector<128x128xf32>
    %c0_4 = arith.constant 0 : index
    %c0_5 = arith.constant 0 : index
    %4 = vector.load %arg3[%c0_4, %c0_5] : memref<1x128xf32, #tpu.memory_space<vmem>>, vector<1x128xf32>
    %5 = vector.broadcast %4 : vector<1x128xf32> to vector<128x128xf32>
    %6 = arith.addf %3, %5 : vector<128x128xf32>
    %7 = vector.shape_cast %6 : vector<128x128xf32> to vector<2x64x128xf32>
    %c0_6 = arith.constant 0 : index
    %c0_7 = arith.constant 0 : index
    %8 = vector.load %arg4[%c0_6, %c0_7] : memref<64x128xf32, #tpu.memory_space<vmem>>, vector<64x128xf32>
    %9 = vector.shape_cast %8 : vector<64x128xf32> to vector<1x64x128xf32>
    %10 = vector.broadcast %9 : vector<1x64x128xf32> to vector<2x64x128xf32>
    %11 = arith.addf %7, %10 : vector<2x64x128xf32>
    %c0_8 = arith.constant 0 : index
    %c0_9 = arith.constant 0 : index
    %c0_10 = arith.constant 0 : index
    %12 = vector.load %arg5[%c0_8, %c0_9, %c0_10] : memref<2x64x128xf32, #tpu.memory_space<vmem>>, vector<2x64x128xf32>
    tpu.vector_store %arg5[%c0_8, %c0_9, %c0_10], %11 {strides = array<i32>} : memref<2x64x128xf32, #tpu.memory_space<vmem>>, vector<2x64x128xf32>,
    return
  }
  func.func @transform_0(%arg0: i32) -> (i32, i32, i32) {
    %c0_i32 = arith.constant 0 : i32
    %c0_i32_0 = arith.constant 0 : i32
    %c0_i32_1 = arith.constant 0 : i32
    return %arg0, %c0_i32, %c0_i32_0 : i32, i32, i32
  }
  func.func @transform_1(%arg0: i32) -> (i32, i32) {
    %c0_i32 = arith.constant 0 : i32
    %c0_i32_0 = arith.constant 0 : i32
    %c0_i32_1 = arith.constant 0 : i32
    return %c0_i32, %c0_i32_0 : i32, i32
  }
  func.func @transform_2(%arg0: i32) -> (i32, i32) {
    %c0_i32 = arith.constant 0 : i32
    %c0_i32_0 = arith.constant 0 : i32
    %c0_i32_1 = arith.constant 0 : i32
    return %c0_i32, %c0_i32_0 : i32, i32
  }
  func.func @transform_3(%arg0: i32) -> (i32, i32) {
    %c0_i32 = arith.constant 0 : i32
    %c0_i32_0 = arith.constant 0 : i32
    %c0_i32_1 = arith.constant 0 : i32
    return %c0_i32, %c0_i32_0 : i32, i32
  }
  func.func @transform_4(%arg0: i32) -> (i32, i32, i32) {
    %c0_i32 = arith.constant 0 : i32
    %c0_i32_0 = arith.constant 0 : i32
    %c0_i32_1 = arith.constant 0 : i32
    return %arg0, %c0_i32, %c0_i32_0 : i32, i32, i32
  }
}

</mosaic_0001>

<llo_original>
// kernel: tpu_custom_call.1
$region0: #{tpu_custom_call.1}
  #allocation0 [shape = 'u32[]', space=smem, size = 0x4, offset = 0x4, fixed_abs, tag = 'smem constant byte address 0x4 - core index']
  #allocation1 [shape = 'u32[72,128]{1,0:T(1,128)}', space=vmem, size = 0x9000, scoped, tag = 'internal scratch']
  %s0 = inlined_call_operand.vmem [shape: f32[8,64,48], index: 0, kind: input, shape index: {}]
  %s1 = inlined_call_operand.vmem [shape: f32[48,128], index: 1, kind: input, shape index: {}]
  %s2 = inlined_call_operand.vmem [shape: f32[1,128], index: 2, kind: input, shape index: {}]
  %s3 = inlined_call_operand.vmem [shape: f32[64,128], index: 3, kind: input, shape index: {}]
  %s4 = inlined_call_operand.hbm [shape: f32[8,64,128], index: 4, kind: output, shape index: {}]
  %s5 = sld [smem:[#allocation0]]
  $region49: #{tpu_custom_call.1} parent=0
    _
  %s7 = ssub.s32 1, %s5
  %s8 = scalar_select 0, %s7, %s5
  $region1: #{tpu_custom_call.1} parent=0
    #allocation2 [shape = 'u8[131072]{0}', space=vmem, size = 0x20000, scoped, tag = 'output window, operand 0']
    #allocation3 [shape = 's32[2]{0}', space=sflag, size = 0x8, scoped, tag = 'scoped memory for tpu_custom_call.1']
    %9 = vsyncpa [#allocation3], 0
    %s10 = scalar_lea.sflag [#allocation3], 1
    %11 = vsyncpa %s10, 0
    loop: start=0, step=1, limit=6
    $region2: #{tpu_custom_call.1} parent=1 // loop_pre_header
      _
    $region3: #{tpu_custom_call.1} parent=1 // loop_header
      %s13 = sphi 0, %s17
      %p14 = scmp.ge.s32.totalorder %s13, 6
      %s23 = sphi 0, %s25
      %s26 = sphi 0, %s23
      %s27 = sphi 0, %s26
      %s43 = sphi 0, %s27
      %s47 = sphi 0, %s47
      %s49 = sphi 0, %s47
      %s50 = sphi 0, %s49
      %s64 = sphi 0, %s50
      %s68 = sphi 0, %s68
      %s70 = sphi 0, %s68
      %s71 = sphi 0, %s70
      %s85 = sphi 0, %s71
      %s89 = sphi 0, %s89
      %s91 = sphi 0, %s89
      %s92 = sphi 0, %s91
      %s106 = sphi 0, %s92
      %s112 = sphi 0, %s114
      %s115 = sphi 0, %s112
      %s116 = sphi 0, %s115
      %s132 = sphi 0, %s116
    $region4: #{tpu_custom_call.1} parent=1 // loop_header_branch
      %16 = sbr.rel (%p14) target = $region8
    $region5: #{tpu_custom_call.1} parent=1 // loop_body
      %s18 = ssub.s32 %s13, 1
      %s19 = ssub.s32 %s13, 2
      %s20 = sadd.s32 %s13, 1
      %s21 = ssub.s32 %s13, %s20
      %p22 = scmp.eq.s32.totalorder %s21, 0
      %s24 = sadd.s32 %s23, 1
      %s25 = scalar_select %p22, %s23, %s24
      %p28 = pneg %p22
      %p29 = scmp.eq.s32.totalorder %s13, 3
      %p30 = por %p28, %p29
      %p31 = scmp.ne.s32.totalorder %s23, %s26
      %p32 = scmp.eq.s32.totalorder %s13, 0
      %p33 = por %p31, %p32
      %p34 = scmp.ne.s32.totalorder %s23, %s26
      %p35 = scmp.eq.s32.totalorder %s18, 3
      %p36 = por %p34, %p35
      %p37 = scmp.ne.s32.totalorder %s26, %s27
      %p38 = scmp.eq.s32.totalorder %s18, 0
      %p39 = por %p37, %p38
      %p40 = scmp.ne.s32.totalorder %s26, %s27
      %p41 = scmp.eq.s32.totalorder %s19, 3
      %p42 = por %p40, %p41
      %p44 = scmp.ne.s32.totalorder %s27, %s43
      %p45 = scmp.eq.s32.totalorder %s19, 0
      %p46 = por %p44, %p45
      %s48 = sadd.s32 %s47, 1
      %p51 = scmp.eq.s32.totalorder %s13, 3
      %p52 = scmp.ne.s32.totalorder %s47, %s49
      %p53 = scmp.eq.s32.totalorder %s13, 0
      %p54 = por %p52, %p53
      %p55 = scmp.ne.s32.totalorder %s47, %s49
      %p56 = scmp.eq.s32.totalorder %s18, 3
      %p57 = por %p55, %p56
      %p58 = scmp.ne.s32.totalorder %s49, %s50
      %p59 = scmp.eq.s32.totalorder %s18, 0
      %p60 = por %p58, %p59
      %p61 = scmp.ne.s32.totalorder %s49, %s50
      %p62 = scmp.eq.s32.totalorder %s19, 3
      %p63 = por %p61, %p62
      %p65 = scmp.ne.s32.totalorder %s50, %s64
      %p66 = scmp.eq.s32.totalorder %s19, 0
      %p67 = por %p65, %p66
      %s69 = sadd.s32 %s68, 1
      %p72 = scmp.eq.s32.totalorder %s13, 3
      %p73 = scmp.ne.s32.totalorder %s68, %s70
      %p74 = scmp.eq.s32.totalorder %s13, 0
      %p75 = por %p73, %p74
      %p76 = scmp.ne.s32.totalorder %s68, %s70
      %p77 = scmp.eq.s32.totalorder %s18, 3
      %p78 = por %p76, %p77
      %p79 = scmp.ne.s32.totalorder %s70, %s71
      %p80 = scmp.eq.s32.totalorder %s18, 0
      %p81 = por %p79, %p80
      %p82 = scmp.ne.s32.totalorder %s70, %s71
      %p83 = scmp.eq.s32.totalorder %s19, 3
      %p84 = por %p82, %p83
      %p86 = scmp.ne.s32.totalorder %s71, %s85
      %p87 = scmp.eq.s32.totalorder %s19, 0
      %p88 = por %p86, %p87
      %s90 = sadd.s32 %s89, 1
      %p93 = scmp.eq.s32.totalorder %s13, 3
      %p94 = scmp.ne.s32.totalorder %s89, %s91
      %p95 = scmp.eq.s32.totalorder %s13, 0
      %p96 = por %p94, %p95
      %p97 = scmp.ne.s32.totalorder %s89, %s91
      %p98 = scmp.eq.s32.totalorder %s18, 3
      %p99 = por %p97, %p98
      %p100 = scmp.ne.s32.totalorder %s91, %s92
      %p101 = scmp.eq.s32.totalorder %s18, 0
      %p102 = por %p100, %p101
      %p103 = scmp.ne.s32.totalorder %s91, %s92
      %p104 = scmp.eq.s32.totalorder %s19, 3
      %p105 = por %p103, %p104
      %p107 = scmp.ne.s32.totalorder %s92, %s106
      %p108 = scmp.eq.s32.totalorder %s19, 0
      %p109 = por %p107, %p108
      %s110 = ssub.s32 %s13, %s20
      %p111 = scmp.eq.s32.totalorder %s110, 0
      %s113 = sadd.s32 %s112, 1
      %s114 = scalar_select %p111, %s112, %s113
      %p117 = pneg %p111
      %p118 = scmp.eq.s32.totalorder %s13, 3
      %p119 = por %p117, %p118
      %p120 = scmp.ne.s32.totalorder %s112, %s115
      %p121 = scmp.eq.s32.totalorder %s13, 0
      %p122 = por %p120, %p121
      %p123 = scmp.ne.s32.totalorder %s112, %s115
      %p124 = scmp.eq.s32.totalorder %s18, 3
      %p125 = por %p123, %p124
      %p126 = scmp.ne.s32.totalorder %s115, %s116
      %p127 = scmp.eq.s32.totalorder %s18, 0
      %p128 = por %p126, %p127
      %p129 = scmp.ne.s32.totalorder %s115, %s116
      %p130 = scmp.eq.s32.totalorder %s19, 3
      %p131 = por %p129, %p130
      %p133 = scmp.ne.s32.totalorder %s116, %s132
      %p134 = scmp.eq.s32.totalorder %s19, 0
      %p135 = por %p133, %p134
      %p136 = scmp.le.s32.totalorder 1, %s13
      %p137 = scmp.lt.s32.totalorder %s13, 5
      %p138 = pnand %p136, %p137
      %p139 = pneg %p138
      // Predicated region
      $region9: #{tpu_custom_call.1} parent=5 // pred_check
        _
      $region10: #{tpu_custom_call.1} parent=5 // pred_check_branch
        %141 = sbr.rel (%p138) target = $region12
      $region11: #{tpu_custom_call.1} parent=5 // pred_region
        %s142 = ssub.s32 %s13, 1
        // Predicated region
        $region13: #{tpu_custom_call.1} parent=11 // pred_check
          %p143 = pneg %p60
        $region14: #{tpu_custom_call.1} parent=11 // pred_check_branch
          %145 = sbr.rel (%p143) target = $region16
        $region15: #{tpu_custom_call.1} parent=11 // pred_region
          _
        $region16: #{tpu_custom_call.1} parent=11 // pred_fallthru
          _
        // Predicated region
        $region17: #{tpu_custom_call.1} parent=11 // pred_check
          %p146 = pneg %p81
        $region18: #{tpu_custom_call.1} parent=11 // pred_check_branch
          %148 = sbr.rel (%p146) target = $region20
        $region19: #{tpu_custom_call.1} parent=11 // pred_region
          _
        $region20: #{tpu_custom_call.1} parent=11 // pred_fallthru
          _
        // Predicated region
        $region21: #{tpu_custom_call.1} parent=11 // pred_check
          %p149 = pneg %p102
        $region22: #{tpu_custom_call.1} parent=11 // pred_check_branch
          %151 = sbr.rel (%p149) target = $region24
        $region23: #{tpu_custom_call.1} parent=11 // pred_region
          _
        $region24: #{tpu_custom_call.1} parent=11 // pred_fallthru
          _
      $region12: #{tpu_custom_call.1} parent=5 // pred_fallthru
        _
      %p152 = scmp.lt.s32.totalorder %s13, 4
      // Predicated region
      $region25: #{tpu_custom_call.1} parent=5 // pred_check
        %p153 = pneg %p152
      $region26: #{tpu_custom_call.1} parent=5 // pred_check_branch
        %155 = sbr.rel (%p153) target = $region28
      $region27: #{tpu_custom_call.1} parent=5 // pred_region
        // Predicated region
        $region29: #{tpu_custom_call.1} parent=27 // pred_check
          %p156 = pneg %p33
        $region30: #{tpu_custom_call.1} parent=27 // pred_check_branch
          %158 = sbr.rel (%p156) target = $region32
        $region31: #{tpu_custom_call.1} parent=27 // pred_region
          %s159 = smul.u32 2, %s13
          %p160 = scmp.lt.s32.totalorder %s159, 7
          %s161 = scalar_select %p160, %s159, 7
          %s162 = smul.addr %s161, 8
          %s163 = smul.addr %s162, 8
          %s164 = scalar_lea.vmem %s0, %s163
          %s165 = smul.u32 2, %s13
        $region32: #{tpu_custom_call.1} parent=27 // pred_fallthru
          _
      $region28: #{tpu_custom_call.1} parent=5 // pred_fallthru
        _
      %p166 = scmp.le.s32.totalorder 1, %s13
      %p167 = scmp.lt.s32.totalorder %s13, 5
      %p168 = pnand %p166, %p167
      %p169 = pneg %p168
      // Predicated region
      $region33: #{tpu_custom_call.1} parent=5 // pred_check
        _
      $region34: #{tpu_custom_call.1} parent=5 // pred_check_branch
        %171 = sbr.rel (%p168) target = $region36
      $region35: #{tpu_custom_call.1} parent=5 // pred_region
        %s172 = ssub.s32 %s13, 1
        %s173 = smul.u32 2, %s18
        %p174 = scmp.lt.s32.totalorder %s173, 7
        %s175 = scalar_select %p174, %s173, 7
        %s176 = smul.addr %s175, 8
        %s177 = smul.addr %s176, 8
        %s178 = scalar_lea.vmem %s0, %s177
        %p179 = pneg %p39
        %p180 = pneg %p36
        %p181 = pneg %p60
        %p182 = pneg %p57
        %p183 = pneg %p81
        %p184 = pneg %p78
        %p185 = pneg %p102
        %p186 = pneg %p99
        %p187 = pneg %p128
        %p188 = pneg %p125
        %s189 = sand.u32 %s115, 1
        %s190 = scalar_lea.sflag [#allocation3], %s189
        %s191 = sand.u32 %s115, 1
        %s192 = smul.addr %s191, 128
        %s193 = scalar_lea.vmem [#allocation2], %s192
        %s194 = smul.u32 2, %s18
        %p195 = scmp.lt.s32.totalorder %s194, 7
        %s196 = scalar_select %p195, %s194, 7
        %s197 = smul.addr %s196, 8
        %s198 = smul.addr %s197, 8
        %s199 = scalar_lea.vmem %s0, %s198
        %s200 = smul.u32 2, %s18
        %s201 = smul.u32 2, %s18
        %v202 = vld [vmem:[%s199] sm:$0xff]
        %v203 = vld [vmem:[%s199 + $0x8] sm:$0xff]
        %v204 = vld [vmem:[%s199 + $0x10] sm:$0xff]
        %v205 = vld [vmem:[%s199 + $0x18] sm:$0xff]
        %v206 = vld [vmem:[%s199 + $0x20] sm:$0xff]
        %v207 = vld [vmem:[%s199 + $0x28] sm:$0xff]
        %v208 = vld [vmem:[%s199 + $0x30] sm:$0xff]
        %v209 = vld [vmem:[%s199 + $0x38] sm:$0xff]
        %v210 = vld [vmem:[%s199 + $0x40] sm:$0xff]
        %v211 = vld [vmem:[%s199 + $0x48] sm:$0xff]
        %v212 = vld [vmem:[%s199 + $0x50] sm:$0xff]
        %v213 = vld [vmem:[%s199 + $0x58] sm:$0xff]
        %v214 = vld [vmem:[%s199 + $0x60] sm:$0xff]
        %v215 = vld [vmem:[%s199 + $0x68] sm:$0xff]
        %v216 = vld [vmem:[%s199 + $0x70] sm:$0xff]
        %v217 = vld [vmem:[%s199 + $0x78] sm:$0xff]
        %v218 = vld [vmem:[%s1] sm:$0xff]
        %v219 = vld [vmem:[%s1 + $0x8] sm:$0xff]
        %v220 = vld [vmem:[%s1 + $0x10] sm:$0xff]
        %v221 = vld [vmem:[%s1 + $0x18] sm:$0xff]
        %v222 = vld [vmem:[%s1 + $0x20] sm:$0xff]
        %v223 = vld [vmem:[%s1 + $0x28] sm:$0xff]
        %v224 = vld [vmem:[%s2] sm:$0x1]
        %v226 = vperm.slane %v224, 0
        %vm228 = vcmask 392192
        %v230 = vsel %vm228, %v202, 0
        %v233 = vsel %vm228, %v203, 0
        %v236 = vsel %vm228, %v204, 0
        %v239 = vsel %vm228, %v205, 0
        %v242 = vsel %vm228, %v206, 0
        %v245 = vsel %vm228, %v207, 0
        %v248 = vsel %vm228, %v208, 0
        %v251 = vsel %vm228, %v209, 0
        %v254 = vsel %vm228, %v210, 0
        %v257 = vsel %vm228, %v211, 0
        %v260 = vsel %vm228, %v212, 0
        %v263 = vsel %vm228, %v213, 0
        %v266 = vsel %vm228, %v214, 0
        %v269 = vsel %vm228, %v215, 0
        %v272 = vsel %vm228, %v216, 0
        %v275 = vsel %vm228, %v217, 0
        %277 = vmatpush.msra.mxu0 0.0
        %278 = vmatpush.msra.mxu0 0.0
        %279 = vmatpush.msra.mxu0 0.0
        %280 = vmatpush.msra.mxu0 0.0
        %281 = vmatpush.msra.mxu0 0.0
        %282 = vmatpush.msra.mxu0 0.0
        %283 = vmatpush.msra.mxu0 0.0
        %284 = vmatpush.msra.mxu0 0.0
        %285 = vmatpush.msra.mxu0 0.0
        %286 = vmatpush.msra.mxu0 0.0
        %287 = vmatpush.msra.mxu0 %v223
        %288 = vmatpush.msra.mxu0 %v222
        %289 = vmatpush.msra.mxu0 %v221
        %290 = vmatpush.msra.mxu0 %v220
        %291 = vmatpush.msra.mxu0 %v219
        %292 = vmatpush.msra.mxu0 %v218
        %293 = vmatmul.f32.gmra.mxu0 %v230
        %v294 = vpop.f32.mrf.mxu0
        %v295 = vadd.f32 %v226, %v294
        %296 = vmatmul.f32.gmra.mxu0 %v233
        %v297 = vpop.f32.mrf.mxu0
        %v298 = vadd.f32 %v226, %v297
        %299 = vmatmul.f32.gmra.mxu0 %v236
        %v300 = vpop.f32.mrf.mxu0
        %v301 = vadd.f32 %v226, %v300
        %302 = vmatmul.f32.gmra.mxu0 %v239
        %v303 = vpop.f32.mrf.mxu0
        %v304 = vadd.f32 %v226, %v303
        %305 = vmatmul.f32.gmra.mxu0 %v242
        %v306 = vpop.f32.mrf.mxu0
        %v307 = vadd.f32 %v226, %v306
        %308 = vmatmul.f32.gmra.mxu0 %v245
        %v309 = vpop.f32.mrf.mxu0
        %v310 = vadd.f32 %v226, %v309
        %311 = vmatmul.f32.gmra.mxu0 %v248
        %v312 = vpop.f32.mrf.mxu0
        %v313 = vadd.f32 %v226, %v312
        %314 = vmatmul.f32.gmra.mxu0 %v251
        %v315 = vpop.f32.mrf.mxu0
        %v316 = vadd.f32 %v226, %v315
        %317 = vmatmul.f32.gmra.mxu0 %v254
        %v318 = vpop.f32.mrf.mxu0
        %v319 = vadd.f32 %v226, %v318
        %320 = vmatmul.f32.gmra.mxu0 %v257
        %v321 = vpop.f32.mrf.mxu0
        %v322 = vadd.f32 %v226, %v321
        %323 = vmatmul.f32.gmra.mxu0 %v260
        %v324 = vpop.f32.mrf.mxu0
        %v325 = vadd.f32 %v226, %v324
        %326 = vmatmul.f32.gmra.mxu0 %v263
        %v327 = vpop.f32.mrf.mxu0
        %v328 = vadd.f32 %v226, %v327
        %329 = vmatmul.f32.gmra.mxu0 %v266
        %v330 = vpop.f32.mrf.mxu0
        %v331 = vadd.f32 %v226, %v330
        %332 = vmatmul.f32.gmra.mxu0 %v269
        %v333 = vpop.f32.mrf.mxu0
        %v334 = vadd.f32 %v226, %v333
        %335 = vmatmul.f32.gmra.mxu0 %v272
        %v336 = vpop.f32.mrf.mxu0
        %v337 = vadd.f32 %v226, %v336
        %338 = vmatmul.f32.gmra.mxu0 %v275
        %v339 = vpop.f32.mrf.mxu0
        %v340 = vadd.f32 %v226, %v339
        %341 = vdwg.mxu0
        %v342 = vld [vmem:[%s3] sm:$0xff]
        %v343 = vld [vmem:[%s3 + $0x8] sm:$0xff]
        %v344 = vld [vmem:[%s3 + $0x10] sm:$0xff]
        %v345 = vld [vmem:[%s3 + $0x18] sm:$0xff]
        %v346 = vld [vmem:[%s3 + $0x20] sm:$0xff]
        %v347 = vld [vmem:[%s3 + $0x28] sm:$0xff]
        %v348 = vld [vmem:[%s3 + $0x30] sm:$0xff]
        %v349 = vld [vmem:[%s3 + $0x38] sm:$0xff]
        %v350 = vadd.f32 %v295, %v342
        %v351 = vadd.f32 %v298, %v343
        %v352 = vadd.f32 %v301, %v344
        %v353 = vadd.f32 %v304, %v345
        %v354 = vadd.f32 %v307, %v346
        %v355 = vadd.f32 %v310, %v347
        %v356 = vadd.f32 %v313, %v348
        %v357 = vadd.f32 %v316, %v349
        %v358 = vadd.f32 %v319, %v342
        %v359 = vadd.f32 %v322, %v343
        %v360 = vadd.f32 %v325, %v344
        %v361 = vadd.f32 %v328, %v345
        %v362 = vadd.f32 %v331, %v346
        %v363 = vadd.f32 %v334, %v347
        %v364 = vadd.f32 %v337, %v348
        %v365 = vadd.f32 %v340, %v349
        %366 = vst [vmem:[%s193] sm:$0xff] %v350
        %367 = vst [vmem:[%s193 + $0x8] sm:$0xff] %v351
        %368 = vst [vmem:[%s193 + $0x10] sm:$0xff] %v352
        %369 = vst [vmem:[%s193 + $0x18] sm:$0xff] %v353
        %370 = vst [vmem:[%s193 + $0x20] sm:$0xff] %v354
        %371 = vst [vmem:[%s193 + $0x28] sm:$0xff] %v355
        %372 = vst [vmem:[%s193 + $0x30] sm:$0xff] %v356
        %373 = vst [vmem:[%s193 + $0x38] sm:$0xff] %v357
        %374 = vst [vmem:[%s193 + $0x40] sm:$0xff] %v358
        %375 = vst [vmem:[%s193 + $0x48] sm:$0xff] %v359
        %376 = vst [vmem:[%s193 + $0x50] sm:$0xff] %v360
        %377 = vst [vmem:[%s193 + $0x58] sm:$0xff] %v361
        %378 = vst [vmem:[%s193 + $0x60] sm:$0xff] %v362
        %379 = vst [vmem:[%s193 + $0x68] sm:$0xff] %v363
        %380 = vst [vmem:[%s193 + $0x70] sm:$0xff] %v364
        %381 = vst [vmem:[%s193 + $0x78] sm:$0xff] %v365
        %s382 = sand.u32 %s115, 1
        %s383 = scalar_lea.sflag [#allocation3], %s382
        %s384 = sand.u32 %s115, 1
        %s385 = smul.addr %s384, 128
        %s386 = scalar_lea.vmem [#allocation2], %s385
        // Predicated region
        $region37: #{tpu_custom_call.1} parent=35 // pred_check
          %p387 = pneg %p125
        $region38: #{tpu_custom_call.1} parent=35 // pred_check_branch
          %389 = sbr.rel (%p387) target = $region40
        $region39: #{tpu_custom_call.1} parent=35 // pred_region
          %s390 = smul.u32 2, %s18
          %392 = vsyncadd %s383, 0
          %s393 = smul.addr %s390, 8
          %s394 = smul.addr %s393, 8
          %s395 = scalar_lea.hbm %s4, %s394
          %s396 = sshll.u32 %s386, 4
          %s397 = int_to_ptr.vmem [resolvable:$true] %s396
          %s398 = sshll.u32 %s395, 4
          %s399 = int_to_ptr.hbm [resolvable:$true] %s398
          %404 = dma.vmem_to_hbm [thread:$0]  %s397, 2048, %s399, %s383, 128, 128, 8
        $region40: #{tpu_custom_call.1} parent=35 // pred_fallthru
          _
      $region36: #{tpu_custom_call.1} parent=5 // pred_fallthru
        _
      %p405 = scmp.le.s32.totalorder 2, %s13
      // Predicated region
      $region41: #{tpu_custom_call.1} parent=5 // pred_check
        %p406 = pneg %p405
      $region42: #{tpu_custom_call.1} parent=5 // pred_check_branch
        %408 = sbr.rel (%p406) target = $region44
      $region43: #{tpu_custom_call.1} parent=5 // pred_region
        %s409 = ssub.s32 %s13, 2
        // Predicated region
        $region45: #{tpu_custom_call.1} parent=43 // pred_check
          %p410 = pneg %p131
        $region46: #{tpu_custom_call.1} parent=43 // pred_check_branch
          %412 = sbr.rel (%p410) target = $region48
        $region47: #{tpu_custom_call.1} parent=43 // pred_region
          %s413 = sand.u32 %s116, 1
          %s414 = scalar_lea.sflag [#allocation3], %s413
          %s415 = sand.u32 %s116, 1
          %s416 = smul.addr %s415, 128
          %s417 = scalar_lea.vmem [#allocation2], %s416
          %419 = dma.done %s414, 2048
        $region48: #{tpu_custom_call.1} parent=43 // pred_fallthru
          _
      $region44: #{tpu_custom_call.1} parent=5 // pred_fallthru
        _
    $region6: #{tpu_custom_call.1} parent=1 // loop_footer
      %s17 = sadd.s32 1, %s13
    $region7: #{tpu_custom_call.1} parent=1 // loop_footer_branch
      %12 = sbr.rel target = $region3
    $region8: #{tpu_custom_call.1} parent=1 // loop_exit
      _
    %420 = vsyncpa [#allocation3], 1
    %s421 = scalar_lea.sflag [#allocation3], 1
    %422 = vsyncpa %s421, 1

</llo_original>
